<compile_context>
chip_gen: v7x
topology: tpu7x:2x2x1
jax: 0.10.0
libtpu: 0.0.40
codegen_flags: <defaults>
</compile_context>

<pallas_src>
import functools

import jax
import jax.numpy as jnp
from jax.experimental import pallas as pl
from jax.experimental.pallas import tpu as pltpu


def _round_up(x, m):
    return (x + m - 1) // m * m


def critic_kernel(s_ref, a_ref, w1s_ref, w1a_ref, b1_ref,
                  w2_ref, b2_ref, w3t_ref, b3_ref, o_ref):
    # fc1 with the concat fused:  h1 = state @ W1s + action @ W1a + b1
    h1 = (jnp.dot(s_ref[...], w1s_ref[...], preferred_element_type=jnp.float32)
          + jnp.dot(a_ref[...], w1a_ref[...], preferred_element_type=jnp.float32)
          + b1_ref[...])
    h1 = jnp.maximum(h1, 0.0)
    # fc2 + ReLU (MXU, f32 accumulate)
    h2 = jnp.dot(h1, w2_ref[...], preferred_element_type=jnp.float32) + b2_ref[...]
    h2 = jnp.maximum(h2, 0.0)
    # fc3 has a single output column: use VPU multiply + lane reduction
    # instead of wasting a full MXU pass on a 384x1 matmul.
    out = jnp.sum(h2 * w3t_ref[...], axis=-1, keepdims=True) + b3_ref[...]
    o_ref[...] = out.astype(o_ref.dtype)


def prepare_critic_params(params, state_dims, action_dims):
    """One-time transform: split w1 for the fused concat and zero-pad the
    hidden dims to multiples of 128 lanes.  Exactly preserves the math."""
    w1, b1, w2, b2, w3, b3 = params
    h1 = w1.shape[1]
    h2 = w2.shape[1]
    h1p = _round_up(h1, 128)   # 400 -> 512
    h2p = _round_up(h2, 128)   # 300 -> 384

    w1s = jnp.pad(w1[:state_dims], ((0, 0), (0, h1p - h1)))
    w1a = jnp.pad(w1[state_dims:state_dims + action_dims],
                  ((0, 0), (0, h1p - h1)))
    b1p = jnp.pad(b1, ((0, 0), (0, h1p - h1)))
    w2p = jnp.pad(w2, ((0, h1p - h1), (0, h2p - h2)))
    b2p = jnp.pad(b2, ((0, 0), (0, h2p - h2)))
    w3t = jnp.pad(w3, ((0, h2p - h2), (0, 0))).T          # (1, h2p)
    return (w1s, w1a, b1p, w2p, b2p, w3t, b3)


@functools.partial(jax.jit, static_argnames=("block_b",))
def critic_forward(state, action, prepared_params, block_b=256):
    """Pallas-backed forward: state (B, S), action (B, A) -> Q-values (B, 1)."""
    w1s, w1a, b1, w2, b2, w3t, b3 = prepared_params
    B, S = state.shape
    A = action.shape[1]
    H1 = w1s.shape[1]
    H2 = w2.shape[1]

    # Batch tile: <=256 (fills the v6e/v7x 256-row MXU), multiple of 8 sublanes.
    tb = min(block_b, _round_up(B, 8))
    b_pad = _round_up(B, tb)
    if b_pad != B:
        state = jnp.pad(state, ((0, b_pad - B), (0, 0)))
        action = jnp.pad(action, ((0, b_pad - B), (0, 0)))

    grid = (pl.cdiv(b_pad, tb),)

    def row_spec(shape):          # tiled along the batch axis
        return pl.BlockSpec(shape, lambda i: (i, 0))

    def const_spec(shape):        # resident in VMEM across the whole grid
        return pl.BlockSpec(shape, lambda i: (0, 0))

    flops = 2 * B * (S * H1 + A * H1 + H1 * H2 + H2)
    bytes_accessed = (4 * (S * H1 + A * H1 + H1 + H1 * H2 + 2 * H2 + 1)
                      + 4 * B * (S + A + 1))

    out = pl.pallas_call(
        critic_kernel,
        out_shape=jax.ShapeDtypeStruct((b_pad, 1), jnp.float32),
        grid=grid,
        in_specs=[
            row_spec((tb, S)),        # state tile
            row_spec((tb, A)),        # action tile
            const_spec((S, H1)),      # w1_state
            const_spec((A, H1)),      # w1_action
            const_spec((1, H1)),      # b1
            const_spec((H1, H2)),     # w2
            const_spec((1, H2)),      # b2
            const_spec((1, H2)),      # w3 (transposed, row vector)
            const_spec((1, 1)),       # b3
        ],
        out_specs=row_spec((tb, 1)),
        compiler_params=pltpu.CompilerParams(
            dimension_semantics=("parallel",)),
        cost_estimate=pl.CostEstimate(
            flops=flops, transcendentals=0, bytes_accessed=bytes_accessed),
    )(state, action, w1s, w1a, b1, w2, b2, w3t, b3)
    return out[:B]


def init_linear(key, fan_in, fan_out):
    """Mirror PyTorch nn.Linear default init: U(-1/sqrt(fan_in), 1/sqrt(fan_in))."""
    kw, kb = jax.random.split(key)
    bound = 1.0 / jnp.sqrt(jnp.float32(fan_in))
    w = jax.random.uniform(kw, (fan_in, fan_out), jnp.float32, -bound, bound)
    b = jax.random.uniform(kb, (1, fan_out), jnp.float32, -bound, bound)
    return w, b


def init_critic_params(key, state_dims, action_dims, fc1_dims=400, fc2_dims=300):
    k1, k2, k3 = jax.random.split(key, 3)
    w1, b1 = init_linear(k1, state_dims + action_dims, fc1_dims)
    w2, b2 = init_linear(k2, fc1_dims, fc2_dims)
    w3, b3 = init_linear(k3, fc2_dims, 1)
    return (w1, b1, w2, b2, w3, b3)


def _reference(state, action, params):
    w1, b1, w2, b2, w3, b3 = params
    x = jnp.concatenate([state, action], axis=1)
    h = jnp.maximum(x @ w1 + b1, 0.0)
    h = jnp.maximum(h @ w2 + b2, 0.0)
    return h @ w3 + b3


if __name__ == "__main__":
    state_dims = 16
    action_dims = 8
    fc1_dims = 400
    fc2_dims = 300

    key = jax.random.PRNGKey(0)
    kp, ks, ka = jax.random.split(key, 3)

    params = init_critic_params(kp, state_dims, action_dims, fc1_dims, fc2_dims)
    prepared = prepare_critic_params(params, state_dims, action_dims)

    # Small, module-consistent shapes.
    batch = 8
    state = jax.random.normal(ks, (batch, state_dims), jnp.float32)
    action = jax.random.normal(ka, (batch, action_dims), jnp.float32)

    q = critic_forward(state, action, prepared)
    q = jax.block_until_ready(q)
    ref = _reference(state, action, params)
    assert q.shape == (batch, 1)
    assert jnp.allclose(q, ref, atol=1e-4, rtol=1e-4)

    # Exercise a multi-tile grid with a ragged batch (tail padding + slicing).
    batch2 = 33
    ks2, ka2 = jax.random.split(jax.random.PRNGKey(1))
    state2 = jax.random.normal(ks2, (batch2, state_dims), jnp.float32)
    action2 = jax.random.normal(ka2, (batch2, action_dims), jnp.float32)
    q2 = critic_forward(state2, action2, prepared, block_b=16)
    q2 = jax.block_until_ready(q2)
    ref2 = _reference(state2, action2, params)
    assert q2.shape == (batch2, 1)
    assert jnp.allclose(q2, ref2, atol=1e-4, rtol=1e-4)

    print("KERNEL_OK")
</pallas_src>

<mosaic_0001>
module attributes {stable_mosaic.version = 11 : i64} {
  func.func @critic_kernel(%arg0: i32, %arg1: memref<8x16xf32, #tpu.memory_space<vmem>>, %arg2: memref<8x8xf32, #tpu.memory_space<vmem>>, %arg3: memref<16x512xf32, #tpu.memory_space<vmem>>, %arg4: memref<8x512xf32, #tpu.memory_space<vmem>>, %arg5: memref<1x512xf32, #tpu.memory_space<vmem>>, %arg6: memref<512x384xf32, #tpu.memory_space<vmem>>, %arg7: memref<1x384xf32, #tpu.memory_space<vmem>>, %arg8: memref<1x384xf32, #tpu.memory_space<vmem>>, %arg9: memref<1x1xf32, #tpu.memory_space<vmem>>, %arg10: memref<8x1xf32, #tpu.memory_space<vmem>>) attributes {dimension_semantics = [#tpu.dimension_semantics<parallel>], iteration_bounds = array<i64: 1>, scalar_prefetch = 0 : i64, scratch_operands = 0 : i64, tpu.core_type = #tpu.core_type<tc>, window_params = [{transform_indices = @transform_0, window_bounds = array<i64: 8, 16>}, {transform_indices = @transform_1, window_bounds = array<i64: 8, 8>}, {pipeline_mode = #tpu.pipeline_mode<synchronous>, transform_indices = @transform_2, window_bounds = array<i64: 16, 512>}, {pipeline_mode = #tpu.pipeline_mode<synchronous>, transform_indices = @transform_3, window_bounds = array<i64: 8, 512>}, {pipeline_mode = #tpu.pipeline_mode<synchronous>, transform_indices = @transform_4, window_bounds = array<i64: 1, 512>}, {pipeline_mode = #tpu.pipeline_mode<synchronous>, transform_indices = @transform_5, window_bounds = array<i64: 512, 384>}, {pipeline_mode = #tpu.pipeline_mode<synchronous>, transform_indices = @transform_6, window_bounds = array<i64: 1, 384>}, {pipeline_mode = #tpu.pipeline_mode<synchronous>, transform_indices = @transform_7, window_bounds = array<i64: 1, 384>}, {pipeline_mode = #tpu.pipeline_mode<synchronous>, transform_indices = @transform_8, window_bounds = array<i64: 1, 1>}, {transform_indices = @transform_9, window_bounds = array<i64: 8, 1>}]} {
    %c0 = arith.constant 0 : index
    %c0_0 = arith.constant 0 : index
    %0 = vector.load %arg1[%c0, %c0_0] : memref<8x16xf32, #tpu.memory_space<vmem>>, vector<8x16xf32>
    %c0_1 = arith.constant 0 : index
    %c0_2 = arith.constant 0 : index
    %1 = vector.load %arg3[%c0_1, %c0_2] : memref<16x512xf32, #tpu.memory_space<vmem>>, vector<16x512xf32>
    %cst = arith.constant dense<0.000000e+00> : vector<8x512xf32>
    %2 = tpu.matmul %0, %1, %cst {dimension_numbers = #tpu.dot_dimension_numbers<[1], [0], [0], [1], [0, 0, 1, 1], [], []>} : vector<8x16xf32>, vector<16x512xf32>, vector<8x512xf32> -> vector<8x512xf32>
    %c0_3 = arith.constant 0 : index
    %c0_4 = arith.constant 0 : index
    %3 = vector.load %arg2[%c0_3, %c0_4] : memref<8x8xf32, #tpu.memory_space<vmem>>, vector<8x8xf32>
    %c0_5 = arith.constant 0 : index
    %c0_6 = arith.constant 0 : index
    %4 = vector.load %arg4[%c0_5, %c0_6] : memref<8x512xf32, #tpu.memory_space<vmem>>, vector<8x512xf32>
    %cst_7 = arith.constant dense<0.000000e+00> : vector<8x512xf32>
    %5 = tpu.matmul %3, %4, %cst_7 {dimension_numbers = #tpu.dot_dimension_numbers<[1], [0], [0], [1], [0, 0, 1, 1], [], []>} : vector<8x8xf32>, vector<8x512xf32>, vector<8x512xf32> -> vector<8x512xf32>
    %6 = arith.addf %2, %5 : vector<8x512xf32>
    %c0_8 = arith.constant 0 : index
    %c0_9 = arith.constant 0 : index
    %7 = vector.load %arg5[%c0_8, %c0_9] : memref<1x512xf32, #tpu.memory_space<vmem>>, vector<1x512xf32>
    %8 = vector.broadcast %7 : vector<1x512xf32> to vector<8x512xf32>
    %9 = arith.addf %6, %8 : vector<8x512xf32>
    %cst_10 = arith.constant 0.000000e+00 : f32
    %10 = vector.broadcast %cst_10 : f32 to vector<8x512xf32>
    %11 = arith.maximumf %9, %10 : vector<8x512xf32>
    %c0_11 = arith.constant 0 : index
    %c0_12 = arith.constant 0 : index
    %12 = vector.load %arg6[%c0_11, %c0_12] : memref<512x384xf32, #tpu.memory_space<vmem>>, vector<512x384xf32>
    %cst_13 = arith.constant dense<0.000000e+00> : vector<8x384xf32>
    %13 = tpu.matmul %11, %12, %cst_13 {dimension_numbers = #tpu.dot_dimension_numbers<[1], [0], [0], [1], [0, 0, 1, 1], [], []>} : vector<8x512xf32>, vector<512x384xf32>, vector<8x384xf32> -> vector<8x384xf32>
    %c0_14 = arith.constant 0 : index
    %c0_15 = arith.constant 0 : index
    %14 = vector.load %arg7[%c0_14, %c0_15] : memref<1x384xf32, #tpu.memory_space<vmem>>, vector<1x384xf32>
    %15 = vector.broadcast %14 : vector<1x384xf32> to vector<8x384xf32>
    %16 = arith.addf %13, %15 : vector<8x384xf32>
    %cst_16 = arith.constant 0.000000e+00 : f32
    %17 = vector.broadcast %cst_16 : f32 to vector<8x384xf32>
    %18 = arith.maximumf %16, %17 : vector<8x384xf32>
    %c0_17 = arith.constant 0 : index
    %c0_18 = arith.constant 0 : index
    %19 = vector.load %arg8[%c0_17, %c0_18] : memref<1x384xf32, #tpu.memory_space<vmem>>, vector<1x384xf32>
    %20 = vector.broadcast %19 : vector<1x384xf32> to vector<8x384xf32>
    %21 = arith.mulf %18, %20 : vector<8x384xf32>
    %cst_19 = arith.constant dense<0.000000e+00> : vector<8xf32>
    %22 = vector.multi_reduction <add>, %21, %cst_19 [1] : vector<8x384xf32> to vector<8xf32>
    %23 = vector.shape_cast %22 : vector<8xf32> to vector<8x1xf32>
    %c0_20 = arith.constant 0 : index
    %c0_21 = arith.constant 0 : index
    %24 = vector.load %arg9[%c0_20, %c0_21] : memref<1x1xf32, #tpu.memory_space<vmem>>, vector<1x1xf32>
    %25 = vector.broadcast %24 : vector<1x1xf32> to vector<8x1xf32>
    %26 = arith.addf %23, %25 : vector<8x1xf32>
    %c0_22 = arith.constant 0 : index
    %c0_23 = arith.constant 0 : index
    %27 = vector.load %arg10[%c0_22, %c0_23] : memref<8x1xf32, #tpu.memory_space<vmem>>, vector<8x1xf32>
    tpu.vector_store %arg10[%c0_22, %c0_23], %26 {strides = array<i32>} : memref<8x1xf32, #tpu.memory_space<vmem>>, vector<8x1xf32>,
    return
  }
  func.func @transform_0(%arg0: i32) -> (i32, i32) {
    %c0_i32 = arith.constant 0 : i32
    %c0_i32_0 = arith.constant 0 : i32
    return %arg0, %c0_i32 : i32, i32
  }
  func.func @transform_1(%arg0: i32) -> (i32, i32) {
    %c0_i32 = arith.constant 0 : i32
    %c0_i32_0 = arith.constant 0 : i32
    return %arg0, %c0_i32 : i32, i32
  }
  func.func @transform_2(%arg0: i32) -> (i32, i32) {
    %c0_i32 = arith.constant 0 : i32
    %c0_i32_0 = arith.constant 0 : i32
    %c0_i32_1 = arith.constant 0 : i32
    return %c0_i32, %c0_i32_0 : i32, i32
  }
  func.func @transform_3(%arg0: i32) -> (i32, i32) {
    %c0_i32 = arith.constant 0 : i32
    %c0_i32_0 = arith.constant 0 : i32
    %c0_i32_1 = arith.constant 0 : i32
    return %c0_i32, %c0_i32_0 : i32, i32
  }
  func.func @transform_4(%arg0: i32) -> (i32, i32) {
    %c0_i32 = arith.constant 0 : i32
    %c0_i32_0 = arith.constant 0 : i32
    %c0_i32_1 = arith.constant 0 : i32
    return %c0_i32, %c0_i32_0 : i32, i32
  }
  func.func @transform_5(%arg0: i32) -> (i32, i32) {
    %c0_i32 = arith.constant 0 : i32
    %c0_i32_0 = arith.constant 0 : i32
    %c0_i32_1 = arith.constant 0 : i32
    return %c0_i32, %c0_i32_0 : i32, i32
  }
  func.func @transform_6(%arg0: i32) -> (i32, i32) {
    %c0_i32 = arith.constant 0 : i32
    %c0_i32_0 = arith.constant 0 : i32
    %c0_i32_1 = arith.constant 0 : i32
    return %c0_i32, %c0_i32_0 : i32, i32
  }
  func.func @transform_7(%arg0: i32) -> (i32, i32) {
    %c0_i32 = arith.constant 0 : i32
    %c0_i32_0 = arith.constant 0 : i32
    %c0_i32_1 = arith.constant 0 : i32
    return %c0_i32, %c0_i32_0 : i32, i32
  }
  func.func @transform_8(%arg0: i32) -> (i32, i32) {
    %c0_i32 = arith.constant 0 : i32
    %c0_i32_0 = arith.constant 0 : i32
    %c0_i32_1 = arith.constant 0 : i32
    return %c0_i32, %c0_i32_0 : i32, i32
  }
  func.func @transform_9(%arg0: i32) -> (i32, i32) {
    %c0_i32 = arith.constant 0 : i32
    %c0_i32_0 = arith.constant 0 : i32
    return %arg0, %c0_i32 : i32, i32
  }
}

</mosaic_0001>

<llo_original>
// kernel: critic_forward.1
$region0: #{critic_forward.1}
  #allocation0 [shape = 'u32[]', space=smem, size = 0x4, offset = 0x4, fixed_abs, tag = 'smem constant byte address 0x4 - core index']
  #allocation1 [shape = 'u32[144,128]{1,0:T(1,128)}', space=vmem, size = 0x12000, scoped, tag = 'internal scratch']
  #allocation2 [shape = 'f32[1,1]{1,0:T(1,128)S(1)}', space=vmem, size = 0x200, scoped, tag = 'scoped memory for critic_forward.1']
  %s0 = inlined_call_operand.hbm [shape: f32[8,16], index: 0, kind: input, shape index: {}]
  %s1 = inlined_call_operand.hbm [shape: f32[8,8], index: 1, kind: input, shape index: {}]
  %s2 = inlined_call_operand.hbm [shape: f32[16,512], index: 2, kind: input, shape index: {}]
  %s3 = inlined_call_operand.hbm [shape: f32[8,512], index: 3, kind: input, shape index: {}]
  %s4 = inlined_call_operand.vmem [shape: f32[1,512], index: 4, kind: input, shape index: {}]
  %s5 = inlined_call_operand.hbm [shape: f32[512,384], index: 5, kind: input, shape index: {}]
  %s6 = inlined_call_operand.vmem [shape: f32[1,384], index: 6, kind: input, shape index: {}]
  %s7 = inlined_call_operand.vmem [shape: f32[1,384], index: 7, kind: input, shape index: {}]
  %s8 = inlined_call_operand.<no memory space> [shape: f32[1,1], index: 8, kind: input, shape index: {}]
  %s9 = inlined_call_operand.vmem [shape: f32[8,1], index: 9, kind: output, shape index: {}]
  %s10 = sld [smem:[#allocation0]]
  $region66: #{critic_forward.1} parent=0
    _
  %s12 = ssub.s32 1, %s10
  %s13 = scalar_select 0, %s12, %s10
  %v14 = vstv %s8
  %15 = vst [vmem:[#allocation2] sm:$0x1] %v14
  $region1: #{critic_forward.1} parent=0
    #allocation3 [shape = 'u8[4096]{0}', space=vmem, size = 0x1000, scoped, tag = 'input window, operand 0, single buffered']
    #allocation4 [shape = 's32[1]{0}', space=sflag, size = 0x4, scoped, tag = 'scoped memory for critic_forward.1']
    #allocation5 [shape = 'u8[4096]{0}', space=vmem, size = 0x1000, scoped, tag = 'input window, operand 1, single buffered']
    #allocation6 [shape = 's32[1]{0}', space=sflag, size = 0x4, scoped, tag = 'scoped memory for critic_forward.1']
    #allocation7 [shape = 'u8[32768]{0}', space=vmem, size = 0x8000, scoped, tag = 'input window, operand 2, single buffered']
    #allocation8 [shape = 'u8[16384]{0}', space=vmem, size = 0x4000, scoped, tag = 'input window, operand 3, single buffered']
    #allocation9 [shape = 's32[1]{0}', space=sflag, size = 0x4, scoped, tag = 'scoped memory for critic_forward.1']
    #allocation10 [shape = 'u8[786432]{0}', space=vmem, size = 0xc0000, scoped, tag = 'input window, operand 5, single buffered']
    %16 = vsyncpa [#allocation4], 0
    %17 = vsyncpa [#allocation6], 0
    %18 = vsyncpa [#allocation9], 0
    // Predicated region
    $region2: #{critic_forward.1} parent=1 // pred_check
      _
    $region3: #{critic_forward.1} parent=1 // pred_check_branch
      %20 = sbr.rel (0) target = $region5
    $region4: #{critic_forward.1} parent=1 // pred_region
      %s22 = ssub.s32 128, 128
      %23 = vsyncadd [#allocation4], %s22
      %s25 = sshll.u32 [#allocation3], 4
      %s26 = int_to_ptr.vmem [resolvable:$true] %s25
      %28 = dma.hbm_to_vmem [thread:$0]  %s0, 128, %s26, [#allocation4]
    $region5: #{critic_forward.1} parent=1 // pred_fallthru
      _
    // Predicated region
    $region6: #{critic_forward.1} parent=1 // pred_check
      _
    $region7: #{critic_forward.1} parent=1 // pred_check_branch
      %30 = sbr.rel (0) target = $region9
    $region8: #{critic_forward.1} parent=1 // pred_region
      %s32 = ssub.s32 128, 128
      %33 = vsyncadd [#allocation6], %s32
      %s35 = sshll.u32 [#allocation5], 4
      %s36 = int_to_ptr.vmem [resolvable:$true] %s35
      %38 = dma.hbm_to_vmem [thread:$0]  %s1, 128, %s36, [#allocation6]
    $region9: #{critic_forward.1} parent=1 // pred_fallthru
      _
    // Predicated region
    $region10: #{critic_forward.1} parent=1 // pred_check
      _
    $region11: #{critic_forward.1} parent=1 // pred_check_branch
      %40 = sbr.rel (0) target = $region13
    $region12: #{critic_forward.1} parent=1 // pred_region
      %s42 = ssub.s32 1024, 1024
      %43 = vsyncadd [#allocation6], %s42
      %s44 = sshll.u32 [#allocation7], 4
      %s45 = int_to_ptr.vmem [resolvable:$true] %s44
      %50 = dma.hbm_to_vmem [thread:$0]  %s2, 1024, %s45, [#allocation6], 512, 512, 32
    $region13: #{critic_forward.1} parent=1 // pred_fallthru
      _
    // Predicated region
    $region14: #{critic_forward.1} parent=1 // pred_check
      _
    $region15: #{critic_forward.1} parent=1 // pred_check_branch
      %52 = sbr.rel (0) target = $region17
    $region16: #{critic_forward.1} parent=1 // pred_region
      %s54 = ssub.s32 512, 512
      %55 = vsyncadd [#allocation9], %s54
      %s57 = sshll.u32 [#allocation8], 4
      %s58 = int_to_ptr.vmem [resolvable:$true] %s57
      %60 = dma.hbm_to_vmem [thread:$0]  %s3, 512, %s58, [#allocation9]
    $region17: #{critic_forward.1} parent=1 // pred_fallthru
      _
    // Predicated region
    $region18: #{critic_forward.1} parent=1 // pred_check
      _
    $region19: #{critic_forward.1} parent=1 // pred_check_branch
      %62 = sbr.rel (0) target = $region21
    $region20: #{critic_forward.1} parent=1 // pred_region
      _
    $region21: #{critic_forward.1} parent=1 // pred_fallthru
      _
    // Predicated region
    $region22: #{critic_forward.1} parent=1 // pred_check
      _
    $region23: #{critic_forward.1} parent=1 // pred_check_branch
      %64 = sbr.rel (0) target = $region25
    $region24: #{critic_forward.1} parent=1 // pred_region
      %s66 = ssub.s32 24576, 24576
      %67 = vsyncadd [#allocation9], %s66
      %s68 = sshll.u32 [#allocation10], 4
      %s69 = int_to_ptr.vmem [resolvable:$true] %s68
      %74 = dma.hbm_to_vmem [thread:$0]  %s5, 24576, %s69, [#allocation9], 384, 384, 24
    $region25: #{critic_forward.1} parent=1 // pred_fallthru
      _
    // Predicated region
    $region26: #{critic_forward.1} parent=1 // pred_check
      _
    $region27: #{critic_forward.1} parent=1 // pred_check_branch
      %76 = sbr.rel (0) target = $region29
    $region28: #{critic_forward.1} parent=1 // pred_region
      _
    $region29: #{critic_forward.1} parent=1 // pred_fallthru
      _
    // Predicated region
    $region30: #{critic_forward.1} parent=1 // pred_check
      _
    $region31: #{critic_forward.1} parent=1 // pred_check_branch
      %78 = sbr.rel (0) target = $region33
    $region32: #{critic_forward.1} parent=1 // pred_region
      _
    $region33: #{critic_forward.1} parent=1 // pred_fallthru
      _
    // Predicated region
    $region34: #{critic_forward.1} parent=1 // pred_check
      _
    $region35: #{critic_forward.1} parent=1 // pred_check_branch
      %80 = sbr.rel (0) target = $region37
    $region36: #{critic_forward.1} parent=1 // pred_region
      _
    $region37: #{critic_forward.1} parent=1 // pred_fallthru
      _
    // Predicated region
    $region38: #{critic_forward.1} parent=1 // pred_check
      _
    $region39: #{critic_forward.1} parent=1 // pred_check_branch
      %82 = sbr.rel (0) target = $region41
    $region40: #{critic_forward.1} parent=1 // pred_region
      %83 = dma.done [#allocation4], 128
    $region41: #{critic_forward.1} parent=1 // pred_fallthru
      _
    // Predicated region
    $region42: #{critic_forward.1} parent=1 // pred_check
      _
    $region43: #{critic_forward.1} parent=1 // pred_check_branch
      %85 = sbr.rel (0) target = $region45
    $region44: #{critic_forward.1} parent=1 // pred_region
      %86 = dma.done [#allocation6], 128
    $region45: #{critic_forward.1} parent=1 // pred_fallthru
      _
    // Predicated region
    $region46: #{critic_forward.1} parent=1 // pred_check
      _
    $region47: #{critic_forward.1} parent=1 // pred_check_branch
      %88 = sbr.rel (0) target = $region49
    $region48: #{critic_forward.1} parent=1 // pred_region
      %89 = dma.done [#allocation6], 1024
    $region49: #{critic_forward.1} parent=1 // pred_fallthru
      _
    // Predicated region
    $region50: #{critic_forward.1} parent=1 // pred_check
      _
    $region51: #{critic_forward.1} parent=1 // pred_check_branch
      %91 = sbr.rel (0) target = $region53
    $region52: #{critic_forward.1} parent=1 // pred_region
      %92 = dma.done [#allocation9], 512
    $region53: #{critic_forward.1} parent=1 // pred_fallthru
      _
    // Predicated region
    $region54: #{critic_forward.1} parent=1 // pred_check
      _
    $region55: #{critic_forward.1} parent=1 // pred_check_branch
      %94 = sbr.rel (0) target = $region57
    $region56: #{critic_forward.1} parent=1 // pred_region
      %95 = dma.done [#allocation9], 24576
    $region57: #{critic_forward.1} parent=1 // pred_fallthru
      _
    %v96 = vld [vmem:[#allocation3] sm:$0xff]
    %v97 = vld [vmem:[#allocation7] sm:$0xff]
    %v98 = vld [vmem:[#allocation7 + $0x8] sm:$0xff]
    %v99 = vld [vmem:[#allocation7 + $0x10] sm:$0xff]
    %v100 = vld [vmem:[#allocation7 + $0x18] sm:$0xff]
    %v101 = vld [vmem:[#allocation7 + $0x20] sm:$0xff]
    %v102 = vld [vmem:[#allocation7 + $0x28] sm:$0xff]
    %v103 = vld [vmem:[#allocation7 + $0x30] sm:$0xff]
    %v104 = vld [vmem:[#allocation7 + $0x38] sm:$0xff]
    %v105 = vld [vmem:[#allocation5] sm:$0xff]
    %v106 = vld [vmem:[#allocation8] sm:$0xff]
    %v107 = vld [vmem:[#allocation8 + $0x8] sm:$0xff]
    %v108 = vld [vmem:[#allocation8 + $0x10] sm:$0xff]
    %v109 = vld [vmem:[#allocation8 + $0x18] sm:$0xff]
    %vm110 = vcmask 64512
    %v112 = vsel %vm110, %v105, 0
    %114 = vmatprep.subr.mxu0 %v107
    %115 = vmatpush1.msra.mxu0 %v106
    %116 = vmatprep.subr.mxu0 0.0
    %117 = vmatpush1.msra.mxu0 0.0
    %118 = vmatprep.subr.mxu0 0.0
    %119 = vmatpush1.msra.mxu0 0.0
    %120 = vmatprep.subr.mxu0 0.0
    %121 = vmatpush1.msra.mxu0 0.0
    %122 = vmatprep.subr.mxu0 0.0
    %123 = vmatpush1.msra.mxu0 0.0
    %124 = vmatprep.subr.mxu0 0.0
    %125 = vmatpush1.msra.mxu0 0.0
    %126 = vmatprep.subr.mxu0 0.0
    %127 = vmatpush1.msra.mxu0 0.0
    %128 = vmatprep.subr.mxu0 0.0
    %129 = vmatpush1.msra.mxu0 0.0
    %130 = vmatprep.subr.mxu0 0.0
    %131 = vmatpush1.msra.mxu0 0.0
    %132 = vmatprep.subr.mxu0 0.0
    %133 = vmatpush1.msra.mxu0 0.0
    %134 = vmatprep.subr.mxu0 0.0
    %135 = vmatpush1.msra.mxu0 0.0
    %136 = vmatprep.subr.mxu0 0.0
    %137 = vmatpush1.msra.mxu0 0.0
    %138 = vmatprep.subr.mxu0 0.0
    %139 = vmatpush1.msra.mxu0 0.0
    %140 = vmatprep.subr.mxu0 0.0
    %141 = vmatpush1.msra.mxu0 0.0
    %142 = vmatprep.subr.mxu0 0.0
    %143 = vmatpush1.msra.mxu0 0.0
    %144 = vmatprep.subr.mxu0 0.0
    %145 = vmatpush1.msra.mxu0 0.0
    %146 = vmatprep.subr.mxu0 0.0
    %147 = vmatpush1.msra.mxu0 0.0
    %148 = vmatprep.subr.mxu0 0.0
    %149 = vmatpush1.msra.mxu0 0.0
    %150 = vmatprep.subr.mxu0 0.0
    %151 = vmatpush1.msra.mxu0 0.0
    %152 = vmatprep.subr.mxu0 0.0
    %153 = vmatpush1.msra.mxu0 0.0
    %154 = vmatprep.subr.mxu0 0.0
    %155 = vmatpush1.msra.mxu0 0.0
    %156 = vmatprep.subr.mxu0 0.0
    %157 = vmatpush1.msra.mxu0 0.0
    %158 = vmatprep.subr.mxu0 0.0
    %159 = vmatpush1.msra.mxu0 0.0
    %160 = vmatprep.subr.mxu0 0.0
    %161 = vmatpush1.msra.mxu0 0.0
    %162 = vmatprep.subr.mxu0 0.0
    %163 = vmatpush1.msra.mxu0 0.0
    %164 = vmatprep.subr.mxu0 0.0
    %165 = vmatpush1.msra.mxu0 0.0
    %166 = vmatprep.subr.mxu0 0.0
    %167 = vmatpush1.msra.mxu0 0.0
    %168 = vmatprep.subr.mxu0 0.0
    %169 = vmatpush1.msra.mxu0 0.0
    %170 = vmatprep.subr.mxu0 0.0
    %171 = vmatpush1.msra.mxu0 0.0
    %172 = vmatprep.subr.mxu0 0.0
    %173 = vmatpush1.msra.mxu0 0.0
    %174 = vmatprep.subr.mxu0 0.0
    %175 = vmatpush1.msra.mxu0 0.0
    %176 = vmatprep.subr.mxu0 0.0
    %177 = vmatpush1.msra.mxu0 0.0
    %178 = vmatprep.mubr.f32.mxu0 0.0
    %179 = vmatmul.mubr.f32.gmra.mrb[0].mxu0 %v112
    %v180 = vpop.f32.mrb[0].mxu0
    %v181 = vadd.f32 0.0, %v180
    %v182 = vpop.f32.mrb[0].mxu0
    %v183 = vadd.f32 0.0, %v182
    %184 = vdwg.mxu0
    %185 = vmatprep.subr.mxu0 %v109
    %186 = vmatpush1.msra.mxu0 %v108
    %187 = vmatprep.subr.mxu0 0.0
    %188 = vmatpush1.msra.mxu0 0.0
    %189 = vmatprep.subr.mxu0 0.0
    %190 = vmatpush1.msra.mxu0 0.0
    %191 = vmatprep.subr.mxu0 0.0
    %192 = vmatpush1.msra.mxu0 0.0
    %193 = vmatprep.subr.mxu0 0.0
    %194 = vmatpush1.msra.mxu0 0.0
    %195 = vmatprep.subr.mxu0 0.0
    %196 = vmatpush1.msra.mxu0 0.0
    %197 = vmatprep.subr.mxu0 0.0
    %198 = vmatpush1.msra.mxu0 0.0
    %199 = vmatprep.subr.mxu0 0.0
    %200 = vmatpush1.msra.mxu0 0.0
    %201 = vmatprep.subr.mxu0 0.0
    %202 = vmatpush1.msra.mxu0 0.0
    %203 = vmatprep.subr.mxu0 0.0
    %204 = vmatpush1.msra.mxu0 0.0
    %205 = vmatprep.subr.mxu0 0.0
    %206 = vmatpush1.msra.mxu0 0.0
    %207 = vmatprep.subr.mxu0 0.0
    %208 = vmatpush1.msra.mxu0 0.0
    %209 = vmatprep.subr.mxu0 0.0
    %210 = vmatpush1.msra.mxu0 0.0
    %211 = vmatprep.subr.mxu0 0.0
    %212 = vmatpush1.msra.mxu0 0.0
    %213 = vmatprep.subr.mxu0 0.0
    %214 = vmatpush1.msra.mxu0 0.0
    %215 = vmatprep.subr.mxu0 0.0
    %216 = vmatpush1.msra.mxu0 0.0
    %217 = vmatprep.subr.mxu0 0.0
    %218 = vmatpush1.msra.mxu0 0.0
    %219 = vmatprep.subr.mxu0 0.0
    %220 = vmatpush1.msra.mxu0 0.0
    %221 = vmatprep.subr.mxu0 0.0
    %222 = vmatpush1.msra.mxu0 0.0
    %223 = vmatprep.subr.mxu0 0.0
    %224 = vmatpush1.msra.mxu0 0.0
    %225 = vmatprep.subr.mxu0 0.0
    %226 = vmatpush1.msra.mxu0 0.0
    %227 = vmatprep.subr.mxu0 0.0
    %228 = vmatpush1.msra.mxu0 0.0
    %229 = vmatprep.subr.mxu0 0.0
    %230 = vmatpush1.msra.mxu0 0.0
    %231 = vmatprep.subr.mxu0 0.0
    %232 = vmatpush1.msra.mxu0 0.0
    %233 = vmatprep.subr.mxu0 0.0
    %234 = vmatpush1.msra.mxu0 0.0
    %235 = vmatprep.subr.mxu0 0.0
    %236 = vmatpush1.msra.mxu0 0.0
    %237 = vmatprep.subr.mxu0 0.0
    %238 = vmatpush1.msra.mxu0 0.0
    %239 = vmatprep.subr.mxu0 0.0
    %240 = vmatpush1.msra.mxu0 0.0
    %241 = vmatprep.subr.mxu0 0.0
    %242 = vmatpush1.msra.mxu0 0.0
    %243 = vmatprep.subr.mxu0 0.0
    %244 = vmatpush1.msra.mxu0 0.0
    %245 = vmatprep.subr.mxu0 0.0
    %246 = vmatpush1.msra.mxu0 0.0
    %247 = vmatprep.subr.mxu0 0.0
    %248 = vmatpush1.msra.mxu0 0.0
    %249 = vmatprep.mubr.f32.mxu0 0.0
    %250 = vmatmul.mubr.f32.gmra.mrb[0].mxu0 %v112
    %v251 = vpop.f32.mrb[0].mxu0
    %v252 = vadd.f32 0.0, %v251
    %v253 = vpop.f32.mrb[0].mxu0
    %v254 = vadd.f32 0.0, %v253
    %255 = vdwg.mxu0
    %vm256 = vcmask 130048
    %v258 = vsel %vm256, %v96, 0
    %260 = vmatprep.subr.mxu0 %v98
    %261 = vmatpush1.msra.mxu0 %v97
    %262 = vmatprep.subr.mxu0 %v102
    %263 = vmatpush1.msra.mxu0 %v101
    %264 = vmatprep.subr.mxu0 0.0
    %265 = vmatpush1.msra.mxu0 0.0
    %266 = vmatprep.subr.mxu0 0.0
    %267 = vmatpush1.msra.mxu0 0.0
    %268 = vmatprep.subr.mxu0 0.0
    %269 = vmatpush1.msra.mxu0 0.0
    %270 = vmatprep.subr.mxu0 0.0
    %271 = vmatpush1.msra.mxu0 0.0
    %272 = vmatprep.subr.mxu0 0.0
    %273 = vmatpush1.msra.mxu0 0.0
    %274 = vmatprep.subr.mxu0 0.0
    %275 = vmatpush1.msra.mxu0 0.0
    %276 = vmatprep.subr.mxu0 0.0
    %277 = vmatpush1.msra.mxu0 0.0
    %278 = vmatprep.subr.mxu0 0.0
    %279 = vmatpush1.msra.mxu0 0.0
    %280 = vmatprep.subr.mxu0 0.0
    %281 = vmatpush1.msra.mxu0 0.0
    %282 = vmatprep.subr.mxu0 0.0
    %283 = vmatpush1.msra.mxu0 0.0
    %284 = vmatprep.subr.mxu0 0.0
    %285 = vmatpush1.msra.mxu0 0.0
    %286 = vmatprep.subr.mxu0 0.0
    %287 = vmatpush1.msra.mxu0 0.0
    %288 = vmatprep.subr.mxu0 0.0
    %289 = vmatpush1.msra.mxu0 0.0
    %290 = vmatprep.subr.mxu0 0.0
    %291 = vmatpush1.msra.mxu0 0.0
    %292 = vmatprep.subr.mxu0 0.0
    %293 = vmatpush1.msra.mxu0 0.0
    %294 = vmatprep.subr.mxu0 0.0
    %295 = vmatpush1.msra.mxu0 0.0
    %296 = vmatprep.subr.mxu0 0.0
    %297 = vmatpush1.msra.mxu0 0.0
    %298 = vmatprep.subr.mxu0 0.0
    %299 = vmatpush1.msra.mxu0 0.0
    %300 = vmatprep.subr.mxu0 0.0
    %301 = vmatpush1.msra.mxu0 0.0
    %302 = vmatprep.subr.mxu0 0.0
    %303 = vmatpush1.msra.mxu0 0.0
    %304 = vmatprep.subr.mxu0 0.0
    %305 = vmatpush1.msra.mxu0 0.0
    %306 = vmatprep.subr.mxu0 0.0
    %307 = vmatpush1.msra.mxu0 0.0
    %308 = vmatprep.subr.mxu0 0.0
    %309 = vmatpush1.msra.mxu0 0.0
    %310 = vmatprep.subr.mxu0 0.0
    %311 = vmatpush1.msra.mxu0 0.0
    %312 = vmatprep.subr.mxu0 0.0
    %313 = vmatpush1.msra.mxu0 0.0
    %314 = vmatprep.subr.mxu0 0.0
    %315 = vmatpush1.msra.mxu0 0.0
    %316 = vmatprep.subr.mxu0 0.0
    %317 = vmatpush1.msra.mxu0 0.0
    %318 = vmatprep.subr.mxu0 0.0
    %319 = vmatpush1.msra.mxu0 0.0
    %320 = vmatprep.subr.mxu0 0.0
    %321 = vmatpush1.msra.mxu0 0.0
    %322 = vmatprep.subr.mxu0 0.0
    %323 = vmatpush1.msra.mxu0 0.0
    %324 = vmatprep.mubr.f32.mxu0 0.0
    %325 = vmatmul.mubr.f32.gmra.mrb[0].mxu0 %v258
    %v326 = vpop.f32.mrb[0].mxu0
    %v327 = vadd.f32 %v181, %v326
    %v328 = vpop.f32.mrb[0].mxu0
    %v329 = vadd.f32 %v183, %v328
    %330 = vdwg.mxu0
    %331 = vmatprep.subr.mxu0 %v100
    %332 = vmatpush1.msra.mxu0 %v99
    %333 = vmatprep.subr.mxu0 %v104
    %334 = vmatpush1.msra.mxu0 %v103
    %335 = vmatprep.subr.mxu0 0.0
    %336 = vmatpush1.msra.mxu0 0.0
    %337 = vmatprep.subr.mxu0 0.0
    %338 = vmatpush1.msra.mxu0 0.0
    %339 = vmatprep.subr.mxu0 0.0
    %340 = vmatpush1.msra.mxu0 0.0
    %341 = vmatprep.subr.mxu0 0.0
    %342 = vmatpush1.msra.mxu0 0.0
    %343 = vmatprep.subr.mxu0 0.0
    %344 = vmatpush1.msra.mxu0 0.0
    %345 = vmatprep.subr.mxu0 0.0
    %346 = vmatpush1.msra.mxu0 0.0
    %347 = vmatprep.subr.mxu0 0.0
    %348 = vmatpush1.msra.mxu0 0.0
    %349 = vmatprep.subr.mxu0 0.0
    %350 = vmatpush1.msra.mxu0 0.0
    %351 = vmatprep.subr.mxu0 0.0
    %352 = vmatpush1.msra.mxu0 0.0
    %353 = vmatprep.subr.mxu0 0.0
    %354 = vmatpush1.msra.mxu0 0.0
    %355 = vmatprep.subr.mxu0 0.0
    %356 = vmatpush1.msra.mxu0 0.0
    %357 = vmatprep.subr.mxu0 0.0
    %358 = vmatpush1.msra.mxu0 0.0
    %359 = vmatprep.subr.mxu0 0.0
    %360 = vmatpush1.msra.mxu0 0.0
    %361 = vmatprep.subr.mxu0 0.0
    %362 = vmatpush1.msra.mxu0 0.0
    %363 = vmatprep.subr.mxu0 0.0
    %364 = vmatpush1.msra.mxu0 0.0
    %365 = vmatprep.subr.mxu0 0.0
    %366 = vmatpush1.msra.mxu0 0.0
    %367 = vmatprep.subr.mxu0 0.0
    %368 = vmatpush1.msra.mxu0 0.0
    %369 = vmatprep.subr.mxu0 0.0
    %370 = vmatpush1.msra.mxu0 0.0
    %371 = vmatprep.subr.mxu0 0.0
    %372 = vmatpush1.msra.mxu0 0.0
    %373 = vmatprep.subr.mxu0 0.0
    %374 = vmatpush1.msra.mxu0 0.0
    %375 = vmatprep.subr.mxu0 0.0
    %376 = vmatpush1.msra.mxu0 0.0
    %377 = vmatprep.subr.mxu0 0.0
    %378 = vmatpush1.msra.mxu0 0.0
    %379 = vmatprep.subr.mxu0 0.0
    %380 = vmatpush1.msra.mxu0 0.0
    %381 = vmatprep.subr.mxu0 0.0
    %382 = vmatpush1.msra.mxu0 0.0
    %383 = vmatprep.subr.mxu0 0.0
    %384 = vmatpush1.msra.mxu0 0.0
    %385 = vmatprep.subr.mxu0 0.0
    %386 = vmatpush1.msra.mxu0 0.0
    %387 = vmatprep.subr.mxu0 0.0
    %388 = vmatpush1.msra.mxu0 0.0
    %389 = vmatprep.subr.mxu0 0.0
    %390 = vmatpush1.msra.mxu0 0.0
    %391 = vmatprep.subr.mxu0 0.0
    %392 = vmatpush1.msra.mxu0 0.0
    %393 = vmatprep.subr.mxu0 0.0
    %394 = vmatpush1.msra.mxu0 0.0
    %395 = vmatprep.mubr.f32.mxu0 0.0
    %396 = vmatmul.mubr.f32.gmra.mrb[0].mxu0 %v258
    %v397 = vpop.f32.mrb[0].mxu0
    %v398 = vadd.f32 %v252, %v397
    %v399 = vpop.f32.mrb[0].mxu0
    %v400 = vadd.f32 %v254, %v399
    %401 = vdwg.mxu0
    %v402 = vld [vmem:[%s4] sm:$0xf]
    %v404 = vlaneseq
    %v405 = vshrl.u32 %v404, 7
    %v406 = vsub.s32 0, %v405
    %v407 = vrot.slane %v402, %v406
    %v408 = vlaneseq
    %v409 = vshrl.u32 %v408, 7
    %v410 = vsub.s32 1, %v409
    %v411 = vrot.slane %v402, %v410
    %v412 = vlaneseq
    %v413 = vshrl.u32 %v412, 7
    %v414 = vsub.s32 2, %v413
    %v415 = vrot.slane %v402, %v414
    %v416 = vlaneseq
    %v417 = vshrl.u32 %v416, 7
    %v418 = vsub.s32 3, %v417
    %v419 = vrot.slane %v402, %v418
    %v424 = vadd.f32 %v327, %v407
    %v425 = vadd.f32 %v329, %v411
    %v426 = vadd.f32 %v398, %v415
    %v427 = vadd.f32 %v400, %v419
    %v428 = vmax.f32 %v424, 0.0
    %v429 = vmax.f32 %v425, 0.0
    %v430 = vmax.f32 %v426, 0.0
    %v431 = vmax.f32 %v427, 0.0
    %v432 = vld [vmem:[#allocation10] sm:$0xff]
    %v433 = vld [vmem:[#allocation10 + $0x8] sm:$0xff]
    %v434 = vld [vmem:[#allocation10 + $0x10] sm:$0xff]
    %v435 = vld [vmem:[#allocation10 + $0x18] sm:$0xff]
    %v436 = vld [vmem:[#allocation10 + $0x20] sm:$0xff]
    %v437 = vld [vmem:[#allocation10 + $0x28] sm:$0xff]
    %v438 = vld [vmem:[#allocation10 + $0x30] sm:$0xff]
    %v439 = vld [vmem:[#allocation10 + $0x38] sm:$0xff]
    %v440 = vld [vmem:[#allocation10 + $0x40] sm:$0xff]
    %v441 = vld [vmem:[#allocation10 + $0x48] sm:$0xff]
    %v442 = vld [vmem:[#allocation10 + $0x50] sm:$0xff]
    %v443 = vld [vmem:[#allocation10 + $0x58] sm:$0xff]
    %v444 = vld [vmem:[#allocation10 + $0x60] sm:$0xff]
    %v445 = vld [vmem:[#allocation10 + $0x68] sm:$0xff]
    %v446 = vld [vmem:[#allocation10 + $0x70] sm:$0xff]
    %v447 = vld [vmem:[#allocation10 + $0x78] sm:$0xff]
    %v448 = vld [vmem:[#allocation10 + $0x80] sm:$0xff]
    %v449 = vld [vmem:[#allocation10 + $0x88] sm:$0xff]
    %v450 = vld [vmem:[#allocation10 + $0x90] sm:$0xff]
    %v451 = vld [vmem:[#allocation10 + $0x98] sm:$0xff]
    %v452 = vld [vmem:[#allocation10 + $0xa0] sm:$0xff]
    %v453 = vld [vmem:[#allocation10 + $0xa8] sm:$0xff]
    %v454 = vld [vmem:[#allocation10 + $0xb0] sm:$0xff]
    %v455 = vld [vmem:[#allocation10 + $0xb8] sm:$0xff]
    %v456 = vld [vmem:[#allocation10 + $0xc0] sm:$0xff]
    %v457 = vld [vmem:[#allocation10 + $0xc8] sm:$0xff]
    %v458 = vld [vmem:[#allocation10 + $0xd0] sm:$0xff]
    %v459 = vld [vmem:[#allocation10 + $0xd8] sm:$0xff]
    %v460 = vld [vmem:[#allocation10 + $0xe0] sm:$0xff]
    %v461 = vld [vmem:[#allocation10 + $0xe8] sm:$0xff]
    %v462 = vld [vmem:[#allocation10 + $0xf0] sm:$0xff]
    %v463 = vld [vmem:[#allocation10 + $0xf8] sm:$0xff]
    %v464 = vld [vmem:[#allocation10 + $0x100] sm:$0xff]
    %v465 = vld [vmem:[#allocation10 + $0x108] sm:$0xff]
    %v466 = vld [vmem:[#allocation10 + $0x110] sm:$0xff]
    %v467 = vld [vmem:[#allocation10 + $0x118] sm:$0xff]
    %v468 = vld [vmem:[#allocation10 + $0x120] sm:$0xff]
    %v469 = vld [vmem:[#allocation10 + $0x128] sm:$0xff]
    %v470 = vld [vmem:[#allocation10 + $0x130] sm:$0xff]
    %v471 = vld [vmem:[#allocation10 + $0x138] sm:$0xff]
    %v472 = vld [vmem:[#allocation10 + $0x140] sm:$0xff]
    %v473 = vld [vmem:[#allocation10 + $0x148] sm:$0xff]
    %v474 = vld [vmem:[#allocation10 + $0x150] sm:$0xff]
    %v475 = vld [vmem:[#allocation10 + $0x158] sm:$0xff]
    %v476 = vld [vmem:[#allocation10 + $0x160] sm:$0xff]
    %v477 = vld [vmem:[#allocation10 + $0x168] sm:$0xff]
    %v478 = vld [vmem:[#allocation10 + $0x170] sm:$0xff]
    %v479 = vld [vmem:[#allocation10 + $0x178] sm:$0xff]
    %v480 = vld [vmem:[#allocation10 + $0x180] sm:$0xff]
    %v481 = vld [vmem:[#allocation10 + $0x188] sm:$0xff]
    %v482 = vld [vmem:[#allocation10 + $0x190] sm:$0xff]
    %v483 = vld [vmem:[#allocation10 + $0x198] sm:$0xff]
    %v484 = vld [vmem:[#allocation10 + $0x1a0] sm:$0xff]
    %v485 = vld [vmem:[#allocation10 + $0x1a8] sm:$0xff]
    %v486 = vld [vmem:[#allocation10 + $0x1b0] sm:$0xff]
    %v487 = vld [vmem:[#allocation10 + $0x1b8] sm:$0xff]
    %v488 = vld [vmem:[#allocation10 + $0x1c0] sm:$0xff]
    %v489 = vld [vmem:[#allocation10 + $0x1c8] sm:$0xff]
    %v490 = vld [vmem:[#allocation10 + $0x1d0] sm:$0xff]
    %v491 = vld [vmem:[#allocation10 + $0x1d8] sm:$0xff]
    %v492 = vld [vmem:[#allocation10 + $0x1e0] sm:$0xff]
    %v493 = vld [vmem:[#allocation10 + $0x1e8] sm:$0xff]
    %v494 = vld [vmem:[#allocation10 + $0x1f0] sm:$0xff]
    %v495 = vld [vmem:[#allocation10 + $0x1f8] sm:$0xff]
    %v496 = vld [vmem:[#allocation10 + $0x200] sm:$0xff]
    %v497 = vld [vmem:[#allocation10 + $0x208] sm:$0xff]
    %v498 = vld [vmem:[#allocation10 + $0x210] sm:$0xff]
    %v499 = vld [vmem:[#allocation10 + $0x218] sm:$0xff]
    %v500 = vld [vmem:[#allocation10 + $0x220] sm:$0xff]
    %v501 = vld [vmem:[#allocation10 + $0x228] sm:$0xff]
    %v502 = vld [vmem:[#allocation10 + $0x230] sm:$0xff]
    %v503 = vld [vmem:[#allocation10 + $0x238] sm:$0xff]
    %v504 = vld [vmem:[#allocation10 + $0x240] sm:$0xff]
    %v505 = vld [vmem:[#allocation10 + $0x248] sm:$0xff]
    %v506 = vld [vmem:[#allocation10 + $0x250] sm:$0xff]
    %v507 = vld [vmem:[#allocation10 + $0x258] sm:$0xff]
    %v508 = vld [vmem:[#allocation10 + $0x260] sm:$0xff]
    %v509 = vld [vmem:[#allocation10 + $0x268] sm:$0xff]
    %v510 = vld [vmem:[#allocation10 + $0x270] sm:$0xff]
    %v511 = vld [vmem:[#allocation10 + $0x278] sm:$0xff]
    %v512 = vld [vmem:[#allocation10 + $0x280] sm:$0xff]
    %v513 = vld [vmem:[#allocation10 + $0x288] sm:$0xff]
    %v514 = vld [vmem:[#allocation10 + $0x290] sm:$0xff]
    %v515 = vld [vmem:[#allocation10 + $0x298] sm:$0xff]
    %v516 = vld [vmem:[#allocation10 + $0x2a0] sm:$0xff]
    %v517 = vld [vmem:[#allocation10 + $0x2a8] sm:$0xff]
    %v518 = vld [vmem:[#allocation10 + $0x2b0] sm:$0xff]
    %v519 = vld [vmem:[#allocation10 + $0x2b8] sm:$0xff]
    %v520 = vld [vmem:[#allocation10 + $0x2c0] sm:$0xff]
    %v521 = vld [vmem:[#allocation10 + $0x2c8] sm:$0xff]
    %v522 = vld [vmem:[#allocation10 + $0x2d0] sm:$0xff]
    %v523 = vld [vmem:[#allocation10 + $0x2d8] sm:$0xff]
    %v524 = vld [vmem:[#allocation10 + $0x2e0] sm:$0xff]
    %v525 = vld [vmem:[#allocation10 + $0x2e8] sm:$0xff]
    %v526 = vld [vmem:[#allocation10 + $0x2f0] sm:$0xff]
    %v527 = vld [vmem:[#allocation10 + $0x2f8] sm:$0xff]
    %v528 = vld [vmem:[#allocation10 + $0x300] sm:$0xff]
    %v529 = vld [vmem:[#allocation10 + $0x308] sm:$0xff]
    %v530 = vld [vmem:[#allocation10 + $0x310] sm:$0xff]
    %v531 = vld [vmem:[#allocation10 + $0x318] sm:$0xff]
    %v532 = vld [vmem:[#allocation10 + $0x320] sm:$0xff]
    %v533 = vld [vmem:[#allocation10 + $0x328] sm:$0xff]
    %v534 = vld [vmem:[#allocation10 + $0x330] sm:$0xff]
    %v535 = vld [vmem:[#allocation10 + $0x338] sm:$0xff]
    %v536 = vld [vmem:[#allocation10 + $0x340] sm:$0xff]
    %v537 = vld [vmem:[#allocation10 + $0x348] sm:$0xff]
    %v538 = vld [vmem:[#allocation10 + $0x350] sm:$0xff]
    %v539 = vld [vmem:[#allocation10 + $0x358] sm:$0xff]
    %v540 = vld [vmem:[#allocation10 + $0x360] sm:$0xff]
    %v541 = vld [vmem:[#allocation10 + $0x368] sm:$0xff]
    %v542 = vld [vmem:[#allocation10 + $0x370] sm:$0xff]
    %v543 = vld [vmem:[#allocation10 + $0x378] sm:$0xff]
    %v544 = vld [vmem:[#allocation10 + $0x380] sm:$0xff]
    %v545 = vld [vmem:[#allocation10 + $0x388] sm:$0xff]
    %v546 = vld [vmem:[#allocation10 + $0x390] sm:$0xff]
    %v547 = vld [vmem:[#allocation10 + $0x398] sm:$0xff]
    %v548 = vld [vmem:[#allocation10 + $0x3a0] sm:$0xff]
    %v549 = vld [vmem:[#allocation10 + $0x3a8] sm:$0xff]
    %v550 = vld [vmem:[#allocation10 + $0x3b0] sm:$0xff]
    %v551 = vld [vmem:[#allocation10 + $0x3b8] sm:$0xff]
    %v552 = vld [vmem:[#allocation10 + $0x3c0] sm:$0xff]
    %v553 = vld [vmem:[#allocation10 + $0x3c8] sm:$0xff]
    %v554 = vld [vmem:[#allocation10 + $0x3d0] sm:$0xff]
    %v555 = vld [vmem:[#allocation10 + $0x3d8] sm:$0xff]
    %v556 = vld [vmem:[#allocation10 + $0x3e0] sm:$0xff]
    %v557 = vld [vmem:[#allocation10 + $0x3e8] sm:$0xff]
    %v558 = vld [vmem:[#allocation10 + $0x3f0] sm:$0xff]
    %v559 = vld [vmem:[#allocation10 + $0x3f8] sm:$0xff]
    %v560 = vld [vmem:[#allocation10 + $0x400] sm:$0xff]
    %v561 = vld [vmem:[#allocation10 + $0x408] sm:$0xff]
    %v562 = vld [vmem:[#allocation10 + $0x410] sm:$0xff]
    %v563 = vld [vmem:[#allocation10 + $0x418] sm:$0xff]
    %v564 = vld [vmem:[#allocation10 + $0x420] sm:$0xff]
    %v565 = vld [vmem:[#allocation10 + $0x428] sm:$0xff]
    %v566 = vld [vmem:[#allocation10 + $0x430] sm:$0xff]
    %v567 = vld [vmem:[#allocation10 + $0x438] sm:$0xff]
    %v568 = vld [vmem:[#allocation10 + $0x440] sm:$0xff]
    %v569 = vld [vmem:[#allocation10 + $0x448] sm:$0xff]
    %v570 = vld [vmem:[#allocation10 + $0x450] sm:$0xff]
    %v571 = vld [vmem:[#allocation10 + $0x458] sm:$0xff]
    %v572 = vld [vmem:[#allocation10 + $0x460] sm:$0xff]
    %v573 = vld [vmem:[#allocation10 + $0x468] sm:$0xff]
    %v574 = vld [vmem:[#allocation10 + $0x470] sm:$0xff]
    %v575 = vld [vmem:[#allocation10 + $0x478] sm:$0xff]
    %v576 = vld [vmem:[#allocation10 + $0x480] sm:$0xff]
    %v577 = vld [vmem:[#allocation10 + $0x488] sm:$0xff]
    %v578 = vld [vmem:[#allocation10 + $0x490] sm:$0xff]
    %v579 = vld [vmem:[#allocation10 + $0x498] sm:$0xff]
    %v580 = vld [vmem:[#allocation10 + $0x4a0] sm:$0xff]
    %v581 = vld [vmem:[#allocation10 + $0x4a8] sm:$0xff]
    %v582 = vld [vmem:[#allocation10 + $0x4b0] sm:$0xff]
    %v583 = vld [vmem:[#allocation10 + $0x4b8] sm:$0xff]
    %v584 = vld [vmem:[#allocation10 + $0x4c0] sm:$0xff]
    %v585 = vld [vmem:[#allocation10 + $0x4c8] sm:$0xff]
    %v586 = vld [vmem:[#allocation10 + $0x4d0] sm:$0xff]
    %v587 = vld [vmem:[#allocation10 + $0x4d8] sm:$0xff]
    %v588 = vld [vmem:[#allocation10 + $0x4e0] sm:$0xff]
    %v589 = vld [vmem:[#allocation10 + $0x4e8] sm:$0xff]
    %v590 = vld [vmem:[#allocation10 + $0x4f0] sm:$0xff]
    %v591 = vld [vmem:[#allocation10 + $0x4f8] sm:$0xff]
    %v592 = vld [vmem:[#allocation10 + $0x500] sm:$0xff]
    %v593 = vld [vmem:[#allocation10 + $0x508] sm:$0xff]
    %v594 = vld [vmem:[#allocation10 + $0x510] sm:$0xff]
    %v595 = vld [vmem:[#allocation10 + $0x518] sm:$0xff]
    %v596 = vld [vmem:[#allocation10 + $0x520] sm:$0xff]
    %v597 = vld [vmem:[#allocation10 + $0x528] sm:$0xff]
    %v598 = vld [vmem:[#allocation10 + $0x530] sm:$0xff]
    %v599 = vld [vmem:[#allocation10 + $0x538] sm:$0xff]
    %v600 = vld [vmem:[#allocation10 + $0x540] sm:$0xff]
    %v601 = vld [vmem:[#allocation10 + $0x548] sm:$0xff]
    %v602 = vld [vmem:[#allocation10 + $0x550] sm:$0xff]
    %v603 = vld [vmem:[#allocation10 + $0x558] sm:$0xff]
    %v604 = vld [vmem:[#allocation10 + $0x560] sm:$0xff]
    %v605 = vld [vmem:[#allocation10 + $0x568] sm:$0xff]
    %v606 = vld [vmem:[#allocation10 + $0x570] sm:$0xff]
    %v607 = vld [vmem:[#allocation10 + $0x578] sm:$0xff]
    %v608 = vld [vmem:[#allocation10 + $0x580] sm:$0xff]
    %v609 = vld [vmem:[#allocation10 + $0x588] sm:$0xff]
    %v610 = vld [vmem:[#allocation10 + $0x590] sm:$0xff]
    %v611 = vld [vmem:[#allocation10 + $0x598] sm:$0xff]
    %v612 = vld [vmem:[#allocation10 + $0x5a0] sm:$0xff]
    %v613 = vld [vmem:[#allocation10 + $0x5a8] sm:$0xff]
    %v614 = vld [vmem:[#allocation10 + $0x5b0] sm:$0xff]
    %v615 = vld [vmem:[#allocation10 + $0x5b8] sm:$0xff]
    %v616 = vld [vmem:[#allocation10 + $0x5c0] sm:$0xff]
    %v617 = vld [vmem:[#allocation10 + $0x5c8] sm:$0xff]
    %v618 = vld [vmem:[#allocation10 + $0x5d0] sm:$0xff]
    %v619 = vld [vmem:[#allocation10 + $0x5d8] sm:$0xff]
    %v620 = vld [vmem:[#allocation10 + $0x5e0] sm:$0xff]
    %v621 = vld [vmem:[#allocation10 + $0x5e8] sm:$0xff]
    %v622 = vld [vmem:[#allocation10 + $0x5f0] sm:$0xff]
    %v623 = vld [vmem:[#allocation10 + $0x5f8] sm:$0xff]
    %v624 = vld [vmem:[%s6] sm:$0x7]
    %v626 = vlaneseq
    %v627 = vshrl.u32 %v626, 7
    %v628 = vsub.s32 0, %v627
    %v629 = vrot.slane %v624, %v628
    %v630 = vlaneseq
    %v631 = vshrl.u32 %v630, 7
    %v632 = vsub.s32 1, %v631
    %v633 = vrot.slane %v624, %v632
    %v634 = vlaneseq
    %v635 = vshrl.u32 %v634, 7
    %v636 = vsub.s32 2, %v635
    %v637 = vrot.slane %v624, %v636
    %641 = vmatprep.subr.mxu0 %v433
    %642 = vmatpush1.msra.mxu0 %v432
    %643 = vmatprep.subr.mxu0 %v436
    %644 = vmatpush1.msra.mxu0 %v435
    %645 = vmatprep.subr.mxu0 %v439
    %646 = vmatpush1.msra.mxu0 %v438
    %647 = vmatprep.subr.mxu0 %v442
    %648 = vmatpush1.msra.mxu0 %v441
    %649 = vmatprep.subr.mxu0 %v445
    %650 = vmatpush1.msra.mxu0 %v444
    %651 = vmatprep.subr.mxu0 %v448
    %652 = vmatpush1.msra.mxu0 %v447
    %653 = vmatprep.subr.mxu0 %v451
    %654 = vmatpush1.msra.mxu0 %v450
    %655 = vmatprep.subr.mxu0 %v454
    %656 = vmatpush1.msra.mxu0 %v453
    %657 = vmatprep.subr.mxu0 %v457
    %658 = vmatpush1.msra.mxu0 %v456
    %659 = vmatprep.subr.mxu0 %v460
    %660 = vmatpush1.msra.mxu0 %v459
    %661 = vmatprep.subr.mxu0 %v463
    %662 = vmatpush1.msra.mxu0 %v462
    %663 = vmatprep.subr.mxu0 %v466
    %664 = vmatpush1.msra.mxu0 %v465
    %665 = vmatprep.subr.mxu0 %v469
    %666 = vmatpush1.msra.mxu0 %v468
    %667 = vmatprep.subr.mxu0 %v472
    %668 = vmatpush1.msra.mxu0 %v471
    %669 = vmatprep.subr.mxu0 %v475
    %670 = vmatpush1.msra.mxu0 %v474
    %671 = vmatprep.subr.mxu0 %v478
    %672 = vmatpush1.msra.mxu0 %v477
    %673 = vmatprep.subr.mxu0 %v481
    %674 = vmatpush1.msra.mxu0 %v480
    %675 = vmatprep.subr.mxu0 %v484
    %676 = vmatpush1.msra.mxu0 %v483
    %677 = vmatprep.subr.mxu0 %v487
    %678 = vmatpush1.msra.mxu0 %v486
    %679 = vmatprep.subr.mxu0 %v490
    %680 = vmatpush1.msra.mxu0 %v489
    %681 = vmatprep.subr.mxu0 %v493
    %682 = vmatpush1.msra.mxu0 %v492
    %683 = vmatprep.subr.mxu0 %v496
    %684 = vmatpush1.msra.mxu0 %v495
    %685 = vmatprep.subr.mxu0 %v499
    %686 = vmatpush1.msra.mxu0 %v498
    %687 = vmatprep.subr.mxu0 %v502
    %688 = vmatpush1.msra.mxu0 %v501
    %689 = vmatprep.subr.mxu0 %v505
    %690 = vmatpush1.msra.mxu0 %v504
    %691 = vmatprep.subr.mxu0 %v508
    %692 = vmatpush1.msra.mxu0 %v507
    %693 = vmatprep.subr.mxu0 %v511
    %694 = vmatpush1.msra.mxu0 %v510
    %695 = vmatprep.subr.mxu0 %v514
    %696 = vmatpush1.msra.mxu0 %v513
    %697 = vmatprep.subr.mxu0 %v517
    %698 = vmatpush1.msra.mxu0 %v516
    %699 = vmatprep.subr.mxu0 %v520
    %700 = vmatpush1.msra.mxu0 %v519
    %701 = vmatprep.subr.mxu0 %v523
    %702 = vmatpush1.msra.mxu0 %v522
    %703 = vmatprep.subr.mxu0 %v526
    %704 = vmatpush1.msra.mxu0 %v525
    %705 = vmatprep.mubr.f32.mxu0 %v429
    %706 = vmatmul.mubr.f32.gmra.mrb[0].mxu0 %v428
    %v707 = vpop.f32.mrb[0].mxu0
    %v708 = vadd.f32 %v629, %v707
    %v709 = vpop.f32.mrb[0].mxu0
    %v710 = vadd.f32 %v633, %v709
    %711 = vdwg.mxu0
    %712 = vmatprep.subr.mxu0 %v529
    %713 = vmatpush1.msra.mxu0 %v528
    %714 = vmatprep.subr.mxu0 %v532
    %715 = vmatpush1.msra.mxu0 %v531
    %716 = vmatprep.subr.mxu0 %v535
    %717 = vmatpush1.msra.mxu0 %v534
    %718 = vmatprep.subr.mxu0 %v538
    %719 = vmatpush1.msra.mxu0 %v537
    %720 = vmatprep.subr.mxu0 %v541
    %721 = vmatpush1.msra.mxu0 %v540
    %722 = vmatprep.subr.mxu0 %v544
    %723 = vmatpush1.msra.mxu0 %v543
    %724 = vmatprep.subr.mxu0 %v547
    %725 = vmatpush1.msra.mxu0 %v546
    %726 = vmatprep.subr.mxu0 %v550
    %727 = vmatpush1.msra.mxu0 %v549
    %728 = vmatprep.subr.mxu0 %v553
    %729 = vmatpush1.msra.mxu0 %v552
    %730 = vmatprep.subr.mxu0 %v556
    %731 = vmatpush1.msra.mxu0 %v555
    %732 = vmatprep.subr.mxu0 %v559
    %733 = vmatpush1.msra.mxu0 %v558
    %734 = vmatprep.subr.mxu0 %v562
    %735 = vmatpush1.msra.mxu0 %v561
    %736 = vmatprep.subr.mxu0 %v565
    %737 = vmatpush1.msra.mxu0 %v564
    %738 = vmatprep.subr.mxu0 %v568
    %739 = vmatpush1.msra.mxu0 %v567
    %740 = vmatprep.subr.mxu0 %v571
    %741 = vmatpush1.msra.mxu0 %v570
    %742 = vmatprep.subr.mxu0 %v574
    %743 = vmatpush1.msra.mxu0 %v573
    %744 = vmatprep.subr.mxu0 %v577
    %745 = vmatpush1.msra.mxu0 %v576
    %746 = vmatprep.subr.mxu0 %v580
    %747 = vmatpush1.msra.mxu0 %v579
    %748 = vmatprep.subr.mxu0 %v583
    %749 = vmatpush1.msra.mxu0 %v582
    %750 = vmatprep.subr.mxu0 %v586
    %751 = vmatpush1.msra.mxu0 %v585
    %752 = vmatprep.subr.mxu0 %v589
    %753 = vmatpush1.msra.mxu0 %v588
    %754 = vmatprep.subr.mxu0 %v592
    %755 = vmatpush1.msra.mxu0 %v591
    %756 = vmatprep.subr.mxu0 %v595
    %757 = vmatpush1.msra.mxu0 %v594
    %758 = vmatprep.subr.mxu0 %v598
    %759 = vmatpush1.msra.mxu0 %v597
    %760 = vmatprep.subr.mxu0 %v601
    %761 = vmatpush1.msra.mxu0 %v600
    %762 = vmatprep.subr.mxu0 %v604
    %763 = vmatpush1.msra.mxu0 %v603
    %764 = vmatprep.subr.mxu0 %v607
    %765 = vmatpush1.msra.mxu0 %v606
    %766 = vmatprep.subr.mxu0 %v610
    %767 = vmatpush1.msra.mxu0 %v609
    %768 = vmatprep.subr.mxu0 %v613
    %769 = vmatpush1.msra.mxu0 %v612
    %770 = vmatprep.subr.mxu0 %v616
    %771 = vmatpush1.msra.mxu0 %v615
    %772 = vmatprep.subr.mxu0 %v619
    %773 = vmatpush1.msra.mxu0 %v618
    %774 = vmatprep.subr.mxu0 %v622
    %775 = vmatpush1.msra.mxu0 %v621
    %776 = vmatprep.mubr.f32.mxu0 %v431
    %777 = vmatmul.mubr.f32.gmra.mrb[0].mxu0 %v430
    %v778 = vpop.f32.mrb[0].mxu0
    %v779 = vadd.f32 %v708, %v778
    %v780 = vpop.f32.mrb[0].mxu0
    %v781 = vadd.f32 %v710, %v780
    %782 = vdwg.mxu0
    %783 = vmatprep.subr.mxu0 0.0
    %784 = vmatpush1.msra.mxu0 %v434
    %785 = vmatprep.subr.mxu0 0.0
    %786 = vmatpush1.msra.mxu0 %v437
    %787 = vmatprep.subr.mxu0 0.0
    %788 = vmatpush1.msra.mxu0 %v440
    %789 = vmatprep.subr.mxu0 0.0
    %790 = vmatpush1.msra.mxu0 %v443
    %791 = vmatprep.subr.mxu0 0.0
    %792 = vmatpush1.msra.mxu0 %v446
    %793 = vmatprep.subr.mxu0 0.0
    %794 = vmatpush1.msra.mxu0 %v449
    %795 = vmatprep.subr.mxu0 0.0
    %796 = vmatpush1.msra.mxu0 %v452
    %797 = vmatprep.subr.mxu0 0.0
    %798 = vmatpush1.msra.mxu0 %v455
    %799 = vmatprep.subr.mxu0 0.0
    %800 = vmatpush1.msra.mxu0 %v458
    %801 = vmatprep.subr.mxu0 0.0
    %802 = vmatpush1.msra.mxu0 %v461
    %803 = vmatprep.subr.mxu0 0.0
    %804 = vmatpush1.msra.mxu0 %v464
    %805 = vmatprep.subr.mxu0 0.0
    %806 = vmatpush1.msra.mxu0 %v467
    %807 = vmatprep.subr.mxu0 0.0
    %808 = vmatpush1.msra.mxu0 %v470
    %809 = vmatprep.subr.mxu0 0.0
    %810 = vmatpush1.msra.mxu0 %v473
    %811 = vmatprep.subr.mxu0 0.0
    %812 = vmatpush1.msra.mxu0 %v476
    %813 = vmatprep.subr.mxu0 0.0
    %814 = vmatpush1.msra.mxu0 %v479
    %815 = vmatprep.subr.mxu0 0.0
    %816 = vmatpush1.msra.mxu0 %v482
    %817 = vmatprep.subr.mxu0 0.0
    %818 = vmatpush1.msra.mxu0 %v485
    %819 = vmatprep.subr.mxu0 0.0
    %820 = vmatpush1.msra.mxu0 %v488
    %821 = vmatprep.subr.mxu0 0.0
    %822 = vmatpush1.msra.mxu0 %v491
    %823 = vmatprep.subr.mxu0 0.0
    %824 = vmatpush1.msra.mxu0 %v494
    %825 = vmatprep.subr.mxu0 0.0
    %826 = vmatpush1.msra.mxu0 %v497
    %827 = vmatprep.subr.mxu0 0.0
    %828 = vmatpush1.msra.mxu0 %v500
    %829 = vmatprep.subr.mxu0 0.0
    %830 = vmatpush1.msra.mxu0 %v503
    %831 = vmatprep.subr.mxu0 0.0
    %832 = vmatpush1.msra.mxu0 %v506
    %833 = vmatprep.subr.mxu0 0.0
    %834 = vmatpush1.msra.mxu0 %v509
    %835 = vmatprep.subr.mxu0 0.0
    %836 = vmatpush1.msra.mxu0 %v512
    %837 = vmatprep.subr.mxu0 0.0
    %838 = vmatpush1.msra.mxu0 %v515
    %839 = vmatprep.subr.mxu0 0.0
    %840 = vmatpush1.msra.mxu0 %v518
    %841 = vmatprep.subr.mxu0 0.0
    %842 = vmatpush1.msra.mxu0 %v521
    %843 = vmatprep.subr.mxu0 0.0
    %844 = vmatpush1.msra.mxu0 %v524
    %845 = vmatprep.subr.mxu0 0.0
    %846 = vmatpush1.msra.mxu0 %v527
    %847 = vmatprep.mubr.f32.mxu0 %v429
    %848 = vmatmul.mubr.f32.gmra.mrb[0].mxu0 %v428
    %v849 = vpop.f32.mrb[0].mxu0
    %v850 = vadd.f32 %v637, %v849
    %v851 = vpop.f32.mrb[0].mxu0
    %852 = vdwg.mxu0
    %853 = vmatprep.subr.mxu0 0.0
    %854 = vmatpush1.msra.mxu0 %v530
    %855 = vmatprep.subr.mxu0 0.0
    %856 = vmatpush1.msra.mxu0 %v533
    %857 = vmatprep.subr.mxu0 0.0
    %858 = vmatpush1.msra.mxu0 %v536
    %859 = vmatprep.subr.mxu0 0.0
    %860 = vmatpush1.msra.mxu0 %v539
    %861 = vmatprep.subr.mxu0 0.0
    %862 = vmatpush1.msra.mxu0 %v542
    %863 = vmatprep.subr.mxu0 0.0
    %864 = vmatpush1.msra.mxu0 %v545
    %865 = vmatprep.subr.mxu0 0.0
    %866 = vmatpush1.msra.mxu0 %v548
    %867 = vmatprep.subr.mxu0 0.0
    %868 = vmatpush1.msra.mxu0 %v551
    %869 = vmatprep.subr.mxu0 0.0
    %870 = vmatpush1.msra.mxu0 %v554
    %871 = vmatprep.subr.mxu0 0.0
    %872 = vmatpush1.msra.mxu0 %v557
    %873 = vmatprep.subr.mxu0 0.0
    %874 = vmatpush1.msra.mxu0 %v560
    %875 = vmatprep.subr.mxu0 0.0
    %876 = vmatpush1.msra.mxu0 %v563
    %877 = vmatprep.subr.mxu0 0.0
    %878 = vmatpush1.msra.mxu0 %v566
    %879 = vmatprep.subr.mxu0 0.0
    %880 = vmatpush1.msra.mxu0 %v569
    %881 = vmatprep.subr.mxu0 0.0
    %882 = vmatpush1.msra.mxu0 %v572
    %883 = vmatprep.subr.mxu0 0.0
    %884 = vmatpush1.msra.mxu0 %v575
    %885 = vmatprep.subr.mxu0 0.0
    %886 = vmatpush1.msra.mxu0 %v578
    %887 = vmatprep.subr.mxu0 0.0
    %888 = vmatpush1.msra.mxu0 %v581
    %889 = vmatprep.subr.mxu0 0.0
    %890 = vmatpush1.msra.mxu0 %v584
    %891 = vmatprep.subr.mxu0 0.0
    %892 = vmatpush1.msra.mxu0 %v587
    %893 = vmatprep.subr.mxu0 0.0
    %894 = vmatpush1.msra.mxu0 %v590
    %895 = vmatprep.subr.mxu0 0.0
    %896 = vmatpush1.msra.mxu0 %v593
    %897 = vmatprep.subr.mxu0 0.0
    %898 = vmatpush1.msra.mxu0 %v596
    %899 = vmatprep.subr.mxu0 0.0
    %900 = vmatpush1.msra.mxu0 %v599
    %901 = vmatprep.subr.mxu0 0.0
    %902 = vmatpush1.msra.mxu0 %v602
    %903 = vmatprep.subr.mxu0 0.0
    %904 = vmatpush1.msra.mxu0 %v605
    %905 = vmatprep.subr.mxu0 0.0
    %906 = vmatpush1.msra.mxu0 %v608
    %907 = vmatprep.subr.mxu0 0.0
    %908 = vmatpush1.msra.mxu0 %v611
    %909 = vmatprep.subr.mxu0 0.0
    %910 = vmatpush1.msra.mxu0 %v614
    %911 = vmatprep.subr.mxu0 0.0
    %912 = vmatpush1.msra.mxu0 %v617
    %913 = vmatprep.subr.mxu0 0.0
    %914 = vmatpush1.msra.mxu0 %v620
    %915 = vmatprep.subr.mxu0 0.0
    %916 = vmatpush1.msra.mxu0 %v623
    %917 = vmatprep.mubr.f32.mxu0 %v431
    %918 = vmatmul.mubr.f32.gmra.mrb[0].mxu0 %v430
    %v919 = vpop.f32.mrb[0].mxu0
    %v920 = vadd.f32 %v850, %v919
    %v921 = vpop.f32.mrb[0].mxu0
    %922 = vdwg.mxu0
    %v923 = vmax.f32 %v779, 0.0
    %v924 = vmax.f32 %v781, 0.0
    %v925 = vmax.f32 %v920, 0.0
    %v926 = vld [vmem:[%s7] sm:$0x7]
    %v928 = vlaneseq
    %v929 = vshrl.u32 %v928, 7
    %v930 = vsub.s32 0, %v929
    %v931 = vrot.slane %v926, %v930
    %v932 = vlaneseq
    %v933 = vshrl.u32 %v932, 7
    %v934 = vsub.s32 1, %v933
    %v935 = vrot.slane %v926, %v934
    %v936 = vlaneseq
    %v937 = vshrl.u32 %v936, 7
    %v938 = vsub.s32 2, %v937
    %v939 = vrot.slane %v926, %v938
    %v943 = vmul.f32 %v923, %v931
    %v944 = vmul.f32 %v924, %v935
    %v945 = vmul.f32 %v925, %v939
    %v946 = vadd.f32 %v943, %v944
    %v947 = vadd.f32 %v946, %v945
    %948 = vadd.xlane.f32.xlu0 %v947
    %v949 = vpop.xlane.xlu0 %948
    %v950 = vld [vmem:[#allocation2] sm:$0x1]
    %v952 = vlaneseq
    %v953 = vshrl.u32 %v952, 7
    %v954 = vsub.s32 0, %v953
    %v955 = vrot.slane %v950, %v954
    %v957 = vadd.f32 %v949, %v955
    %vm958 = vcmask 7168
    %959 = vst.msk [vmem:[%s9] sm:$0xff] %vm958, %v957
    // Predicated region
    $region58: #{critic_forward.1} parent=1 // pred_check
      _
    $region59: #{critic_forward.1} parent=1 // pred_check_branch
      %961 = sbr.rel (0) target = $region61
    $region60: #{critic_forward.1} parent=1 // pred_region
      _
    $region61: #{critic_forward.1} parent=1 // pred_fallthru
      _
    // Predicated region
    $region62: #{critic_forward.1} parent=1 // pred_check
      _
    $region63: #{critic_forward.1} parent=1 // pred_check_branch
      %963 = sbr.rel (0) target = $region65
    $region64: #{critic_forward.1} parent=1 // pred_region
      _
    $region65: #{critic_forward.1} parent=1 // pred_fallthru
      _
    %964 = vsyncpa [#allocation4], 1
    %965 = vsyncpa [#allocation6], 1
    %966 = vsyncpa [#allocation9], 1

</llo_original>
